<compile_context>
chip_gen: v5e
topology: v5e:2x2
jax: 0.10.0
libtpu: 0.0.40
codegen_flags: <defaults>
</compile_context>

<pallas_src>
import jax
import jax.numpy as jnp
from jax.experimental import pallas as pl
from jax.experimental.pallas import tpu as pltpu


# ---------------------------------------------------------------------------
# Pallas kernel: one fused GEMM + bias + ReLU per (image, spatial-block) step
# ---------------------------------------------------------------------------
def _conv_gemm_kernel(xt_ref, w_ref, b_ref, o_ref):
    """One grid step = one image (n) x one flat-spatial block (j).

    xt_ref : (9*C, L_blk)  tap-plane slab: (tap, channel) on sublanes,
             flattened output-spatial positions on lanes.
    w_ref  : (Cout, 9*C)   stacked conv weights (tap-major, matching xt).
    b_ref  : (Cout, 1)     bias (f32).
    o_ref  : (Cout, L_blk) lane-dense output slab; single store per step.
    """
    acc = jnp.dot(w_ref[...], xt_ref[...], preferred_element_type=jnp.float32)
    o_ref[...] = jnp.maximum(acc + b_ref[...], 0.0).astype(o_ref.dtype)


# ---------------------------------------------------------------------------
# Concrete feature extractor matching the BaseFeatureExtractor interface
# ---------------------------------------------------------------------------
class ConvFeatureExtractor:
    """Concrete BaseFeatureExtractor: 3x3 stride-2 conv + bias + ReLU."""

    KH = 3
    KW = 3
    PAD = 1
    STRIDE = 2
    MAX_BLOCK_LANES = 2048            # target output slab width per grid step
    VMEM_INPUT_BUDGET = 8 * 1024 * 1024   # double-buffered input block budget

    def __init__(self, in_channels: int, out_channels: int, key,
                 compute_dtype=jnp.float32):
        self._in_channels = in_channels
        self._out_channels = out_channels
        self.compute_dtype = compute_dtype
        k_w, k_b = jax.random.split(key)
        fan_in = in_channels * self.KH * self.KW
        bound = 1.0 / jnp.sqrt(fan_in)
        # PyTorch Conv2d weight layout: (Cout, Cin, KH, KW), uniform(-b, b)
        self.weight = jax.random.uniform(
            k_w, (out_channels, in_channels, self.KH, self.KW),
            dtype=jnp.float32, minval=-bound, maxval=bound)
        self.bias = jax.random.uniform(
            k_b, (out_channels,), dtype=jnp.float32, minval=-bound,
            maxval=bound)

    @property
    def vertical_scale(self) -> int:
        return 2

    @property
    def horizontal_scale(self) -> int:
        return 2

    @property
    def output_channels(self) -> int:
        return self._out_channels

    def __call__(self, x):
        return self.forward(x)

    def forward(self, x):
        """x: NCHW float32 -> NCHW float32 (N, Cout, ceil(H/2), ceil(W/2))."""
        N, C, H, W = x.shape
        assert C == self._in_channels, (C, self._in_channels)
        Cout = self._out_channels
        OH = (H + 2 * self.PAD - self.KH) // self.STRIDE + 1   # = ceil(H/2)
        OW = (W + 2 * self.PAD - self.KW) // self.STRIDE + 1   # = ceil(W/2)
        L_total = OH * OW

        # ---- layout plumbing (plain JAX, no in-kernel relayout) -----------
        # Pad so every tap index 2*o + k (k in 0..2) is in range.  For even
        # H/W the conv's bottom/right pad row is never touched, hence max(0,·).
        pad_b = max(0, 2 * OH - H)
        pad_r = max(0, 2 * OW - W)
        xp = jnp.pad(x, ((0, 0), (0, 0),
                         (self.PAD, pad_b), (self.PAD, pad_r)))

        # 9 stride-2 decimated tap planes, tap t = kh*3 + kw:
        #   taps[t][n, c, oh, ow] = xp[n, c, 2*oh + kh, 2*ow + kw]
        taps = [xp[:, :, kh:kh + 2 * OH:2, kw:kw + 2 * OW:2]
                for kh in range(3) for kw in range(3)]
        xt = jnp.stack(taps, axis=1)                 # (N, 9, C, OH, OW)
        xt = xt.reshape(N, 9 * C, L_total)           # adjacent merges -> free

        # Weights (Cout, C, KH, KW) -> (Cout, 9*C), same (tap, channel) order.
        w2 = jnp.transpose(self.weight, (0, 2, 3, 1)).reshape(Cout, 9 * C)
        b2 = self.bias.reshape(Cout, 1).astype(jnp.float32)

        # Optional bf16 storage for the dominant HBM streams (f32 accumulate).
        xt = xt.astype(self.compute_dtype)
        w2 = w2.astype(self.compute_dtype)

        # ---- adaptive lane blocking (review item 8) ------------------------
        itemsize = jnp.dtype(self.compute_dtype).itemsize
        max_by_vmem = self.VMEM_INPUT_BUDGET // (2 * 9 * C * itemsize)
        max_lanes = int(min(self.MAX_BLOCK_LANES,
                            max(128, (max_by_vmem // 128) * 128)))
        if L_total <= max_lanes:
            l_blk, l_pad = L_total, L_total      # single block = full-dim spec
        else:
            l_blk = max_lanes                    # multiple of 128
            l_pad = ((L_total + l_blk - 1) // l_blk) * l_blk
            xt = jnp.pad(xt, ((0, 0), (0, 0), (0, l_pad - L_total)))

        grid = (N, l_pad // l_blk)

        out_flat = pl.pallas_call(
            _conv_gemm_kernel,
            out_shape=jax.ShapeDtypeStruct((N, Cout, l_pad), jnp.float32),
            grid=grid,
            in_specs=[
                # Spatially tiled tap-plane slab: no whole-image residency.
                pl.BlockSpec((None, 9 * C, l_blk), lambda n, j: (n, 0, j)),
                pl.BlockSpec((Cout, 9 * C), lambda n, j: (0, 0)),
                pl.BlockSpec((Cout, 1), lambda n, j: (0, 0)),
            ],
            # Lane-dense flat output slab; single store per step.
            out_specs=pl.BlockSpec((None, Cout, l_blk), lambda n, j: (n, 0, j)),
            compiler_params=pltpu.CompilerParams(
                dimension_semantics=("parallel", "parallel"),
                # Blocks are small; 32 MiB is safe on v5e/v6e/v7x alike.
                vmem_limit_bytes=32 * 1024 * 1024,
            ),
        )(xt, w2, b2)

        if l_pad > L_total:
            out_flat = out_flat[:, :, :L_total]
        return out_flat.reshape(N, Cout, OH, OW)   # contiguous reshape: free


# ---------------------------------------------------------------------------
# Pure-JAX reference (lax conv) for a correctness check
# ---------------------------------------------------------------------------
def _reference_forward(extractor, x, round_dtype=None):
    w = extractor.weight
    if round_dtype is not None:   # emulate low-precision storage of the kernel
        x = x.astype(round_dtype).astype(jnp.float32)
        w = w.astype(round_dtype).astype(jnp.float32)
    y = jax.lax.conv_general_dilated(
        x, w,
        window_strides=(extractor.vertical_scale, extractor.horizontal_scale),
        padding=((extractor.PAD, extractor.PAD),
                 (extractor.PAD, extractor.PAD)),
        dimension_numbers=("NCHW", "OIHW", "NCHW"))
    y = y + extractor.bias.reshape(1, -1, 1, 1)
    return jnp.maximum(y, 0.0)


if __name__ == "__main__":
    key = jax.random.PRNGKey(0)
    k_x, k_params = jax.random.split(key)

    N, C, H, W = 2, 4, 16, 16
    x = jax.random.normal(k_x, (N, C, H, W), dtype=jnp.float32)

    # --- f32 path: tight check vs f32 lax reference ------------------------
    extractor = ConvFeatureExtractor(in_channels=C, out_channels=8,
                                     key=k_params)
    out = jax.block_until_ready(extractor(x))

    OH = (H + 2 * extractor.PAD - extractor.KH) // 2 + 1
    OW = (W + 2 * extractor.PAD - extractor.KW) // 2 + 1
    assert OH == -(-H // extractor.vertical_scale)
    assert OW == -(-W // extractor.horizontal_scale)
    assert out.shape == (N, extractor.output_channels, OH, OW), out.shape

    ref = jax.block_until_ready(_reference_forward(extractor, x))
    assert jnp.allclose(out, ref, atol=1e-4, rtol=1e-4), \
        float(jnp.max(jnp.abs(out - ref)))

    # --- bf16 storage path: compare vs a bf16-rounded reference ------------
    extractor16 = ConvFeatureExtractor(in_channels=C, out_channels=8,
                                       key=k_params,
                                       compute_dtype=jnp.bfloat16)
    out16 = jax.block_until_ready(extractor16(x))
    ref16 = jax.block_until_ready(
        _reference_forward(extractor16, x, round_dtype=jnp.bfloat16))
    assert out16.shape == (N, extractor16.output_channels, OH, OW)
    assert jnp.allclose(out16, ref16, atol=1e-2, rtol=1e-2), \
        float(jnp.max(jnp.abs(out16 - ref16)))

    print("KERNEL_OK")
</pallas_src>

<mosaic_0001>
module attributes {stable_mosaic.version = 11 : i64} {
  func.func @_conv_gemm_kernel(%arg0: i32, %arg1: i32, %arg2: memref<1x36x64xf32, #tpu.memory_space<vmem>>, %arg3: memref<8x36xf32, #tpu.memory_space<vmem>>, %arg4: memref<8x1xf32, #tpu.memory_space<vmem>>, %arg5: memref<1x8x64xf32, #tpu.memory_space<vmem>>) attributes {dimension_semantics = [#tpu.dimension_semantics<parallel>, #tpu.dimension_semantics<parallel>], iteration_bounds = array<i64: 2, 1>, scalar_prefetch = 0 : i64, scratch_operands = 0 : i64, tpu.core_type = #tpu.core_type<tc>, window_params = [{transform_indices = @transform_0, window_bounds = array<i64: 1, 36, 64>}, {pipeline_mode = #tpu.pipeline_mode<synchronous>, transform_indices = @transform_1, window_bounds = array<i64: 8, 36>}, {pipeline_mode = #tpu.pipeline_mode<synchronous>, transform_indices = @transform_2, window_bounds = array<i64: 8, 1>}, {transform_indices = @transform_3, window_bounds = array<i64: 1, 8, 64>}]} {
    %c0 = arith.constant 0 : index
    %c0_0 = arith.constant 0 : index
    %0 = vector.load %arg3[%c0, %c0_0] : memref<8x36xf32, #tpu.memory_space<vmem>>, vector<8x36xf32>
    %c0_1 = arith.constant 0 : index
    %c0_2 = arith.constant 0 : index
    %c0_3 = arith.constant 0 : index
    %1 = vector.load %arg2[%c0_1, %c0_2, %c0_3] : memref<1x36x64xf32, #tpu.memory_space<vmem>>, vector<1x36x64xf32>
    %2 = vector.shape_cast %1 : vector<1x36x64xf32> to vector<36x64xf32>
    %cst = arith.constant dense<0.000000e+00> : vector<8x64xf32>
    %3 = tpu.matmul %0, %2, %cst {dimension_numbers = #tpu.dot_dimension_numbers<[1], [0], [0], [1], [0, 0, 1, 1], [], []>} : vector<8x36xf32>, vector<36x64xf32>, vector<8x64xf32> -> vector<8x64xf32>
    %c0_4 = arith.constant 0 : index
    %c0_5 = arith.constant 0 : index
    %4 = vector.load %arg4[%c0_4, %c0_5] : memref<8x1xf32, #tpu.memory_space<vmem>>, vector<8x1xf32>
    %5 = vector.broadcast %4 : vector<8x1xf32> to vector<8x64xf32>
    %6 = arith.addf %3, %5 : vector<8x64xf32>
    %cst_6 = arith.constant 0.000000e+00 : f32
    %7 = vector.broadcast %cst_6 : f32 to vector<8x64xf32>
    %8 = arith.maximumf %6, %7 : vector<8x64xf32>
    %c0_7 = arith.constant 0 : index
    %c0_8 = arith.constant 0 : index
    %c0_9 = arith.constant 0 : index
    %9 = vector.load %arg5[%c0_7, %c0_8, %c0_9] : memref<1x8x64xf32, #tpu.memory_space<vmem>>, vector<1x8x64xf32>
    %10 = vector.shape_cast %9 : vector<1x8x64xf32> to vector<8x64xf32>
    %11 = vector.shape_cast %8 : vector<8x64xf32> to vector<1x8x64xf32>
    tpu.vector_store %arg5[%c0_7, %c0_8, %c0_9], %11 {strides = array<i32>} : memref<1x8x64xf32, #tpu.memory_space<vmem>>, vector<1x8x64xf32>,
    return
  }
  func.func @transform_0(%arg0: i32, %arg1: i32) -> (i32, i32, i32) {
    %c0_i32 = arith.constant 0 : i32
    %c0_i32_0 = arith.constant 0 : i32
    return %arg0, %c0_i32, %arg1 : i32, i32, i32
  }
  func.func @transform_1(%arg0: i32, %arg1: i32) -> (i32, i32) {
    %c0_i32 = arith.constant 0 : i32
    %c0_i32_0 = arith.constant 0 : i32
    %c0_i32_1 = arith.constant 0 : i32
    return %c0_i32, %c0_i32_0 : i32, i32
  }
  func.func @transform_2(%arg0: i32, %arg1: i32) -> (i32, i32) {
    %c0_i32 = arith.constant 0 : i32
    %c0_i32_0 = arith.constant 0 : i32
    %c0_i32_1 = arith.constant 0 : i32
    return %c0_i32, %c0_i32_0 : i32, i32
  }
  func.func @transform_3(%arg0: i32, %arg1: i32) -> (i32, i32, i32) {
    %c0_i32 = arith.constant 0 : i32
    %c0_i32_0 = arith.constant 0 : i32
    return %arg0, %c0_i32, %arg1 : i32, i32, i32
  }
}

</mosaic_0001>

<llo_original>
// kernel: tpu_custom_call.1
$region0: #{tpu_custom_call.1}
  #allocation0 [shape = 'u32[]', space=smem, size = 0x4, offset = 0x4, fixed_abs, tag = 'smem constant byte address 0x4 - core index']
  #allocation1 [shape = 'u32[72,128]{1,0:T(1,128)}', space=vmem, size = 0x9000, scoped, tag = 'internal scratch']
  %s0 = inlined_call_operand.vmem [shape: f32[2,36,64], index: 0, kind: input, shape index: {}]
  %s1 = inlined_call_operand.vmem [shape: f32[8,36], index: 1, kind: input, shape index: {}]
  %s2 = inlined_call_operand.vmem [shape: f32[8,1], index: 2, kind: input, shape index: {}]
  %s3 = inlined_call_operand.hbm [shape: f32[2,8,64], index: 3, kind: output, shape index: {}]
  %s4 = sld [smem:[#allocation0]]
  $region45: #{tpu_custom_call.1} parent=0
    _
  %s6 = ssub.s32 1, %s4
  %s7 = scalar_select 0, %s6, %s4
  $region1: #{tpu_custom_call.1} parent=0
    #allocation2 [shape = 'u8[8192]{0}', space=vmem, size = 0x2000, scoped, tag = 'output window, operand 0']
    #allocation3 [shape = 's32[2]{0}', space=sflag, size = 0x8, scoped, tag = 'scoped memory for tpu_custom_call.1']
    %8 = vsyncpa [#allocation3], 0
    %s9 = scalar_lea.sflag [#allocation3], 1
    %10 = vsyncpa %s9, 0
    loop: start=0, step=1, limit=4
    $region2: #{tpu_custom_call.1} parent=1 // loop_pre_header
      _
    $region3: #{tpu_custom_call.1} parent=1 // loop_header
      %s12 = sphi 0, %s16
      %p13 = scmp.ge.s32.totalorder %s12, 4
      %s19 = sphi 0, %s31
      %s20 = sphi 0, %s27
      %s21 = sphi 0, %s19
      %s22 = sphi 0, %s20
      %s23 = sphi 0, %s21
      %s24 = sphi 0, %s22
      %s36 = sphi 0, %s38
      %s39 = sphi 0, %s36
      %s40 = sphi 0, %s39
      %s56 = sphi 0, %s40
      %s60 = sphi 0, %s60
      %s62 = sphi 0, %s60
      %s63 = sphi 0, %s62
      %s77 = sphi 0, %s63
      %s81 = sphi 0, %s81
      %s83 = sphi 0, %s81
      %s84 = sphi 0, %s83
      %s98 = sphi 0, %s84
      %s106 = sphi 0, %s108
      %s109 = sphi 0, %s106
      %s110 = sphi 0, %s109
      %s126 = sphi 0, %s110
    $region4: #{tpu_custom_call.1} parent=1 // loop_header_branch
      %15 = sbr.rel (%p13) target = $region8
    $region5: #{tpu_custom_call.1} parent=1 // loop_body
      %s17 = ssub.s32 %s12, 1
      %s18 = ssub.s32 %s12, 2
      %s25 = sadd.s32 1, %s20
      %p26 = scmp.ge.s32.totalorder %s25, 1
      %s27 = scalar_select %p26, 0, %s25
      %s28 = sadd.s32 1, %s19
      %s29 = scalar_select %p26, %s28, %s19
      %p30 = scmp.ge.s32.totalorder %s29, 2
      %s31 = scalar_select %p30, 0, %s29
      %s32 = ssub.s32 %s19, %s31
      %s33 = ssub.s32 %s20, %s27
      %s34 = sor.u32 %s32, %s33
      %p35 = scmp.eq.s32.totalorder %s34, 0
      %s37 = sadd.s32 %s36, 1
      %s38 = scalar_select %p35, %s36, %s37
      %p41 = pneg %p35
      %p42 = scmp.eq.s32.totalorder %s12, 1
      %p43 = por %p41, %p42
      %p44 = scmp.ne.s32.totalorder %s36, %s39
      %p45 = scmp.eq.s32.totalorder %s12, 0
      %p46 = por %p44, %p45
      %p47 = scmp.ne.s32.totalorder %s36, %s39
      %p48 = scmp.eq.s32.totalorder %s17, 1
      %p49 = por %p47, %p48
      %p50 = scmp.ne.s32.totalorder %s39, %s40
      %p51 = scmp.eq.s32.totalorder %s17, 0
      %p52 = por %p50, %p51
      %p53 = scmp.ne.s32.totalorder %s39, %s40
      %p54 = scmp.eq.s32.totalorder %s18, 1
      %p55 = por %p53, %p54
      %p57 = scmp.ne.s32.totalorder %s40, %s56
      %p58 = scmp.eq.s32.totalorder %s18, 0
      %p59 = por %p57, %p58
      %s61 = sadd.s32 %s60, 1
      %p64 = scmp.eq.s32.totalorder %s12, 1
      %p65 = scmp.ne.s32.totalorder %s60, %s62
      %p66 = scmp.eq.s32.totalorder %s12, 0
      %p67 = por %p65, %p66
      %p68 = scmp.ne.s32.totalorder %s60, %s62
      %p69 = scmp.eq.s32.totalorder %s17, 1
      %p70 = por %p68, %p69
      %p71 = scmp.ne.s32.totalorder %s62, %s63
      %p72 = scmp.eq.s32.totalorder %s17, 0
      %p73 = por %p71, %p72
      %p74 = scmp.ne.s32.totalorder %s62, %s63
      %p75 = scmp.eq.s32.totalorder %s18, 1
      %p76 = por %p74, %p75
      %p78 = scmp.ne.s32.totalorder %s63, %s77
      %p79 = scmp.eq.s32.totalorder %s18, 0
      %p80 = por %p78, %p79
      %s82 = sadd.s32 %s81, 1
      %p85 = scmp.eq.s32.totalorder %s12, 1
      %p86 = scmp.ne.s32.totalorder %s81, %s83
      %p87 = scmp.eq.s32.totalorder %s12, 0
      %p88 = por %p86, %p87
      %p89 = scmp.ne.s32.totalorder %s81, %s83
      %p90 = scmp.eq.s32.totalorder %s17, 1
      %p91 = por %p89, %p90
      %p92 = scmp.ne.s32.totalorder %s83, %s84
      %p93 = scmp.eq.s32.totalorder %s17, 0
      %p94 = por %p92, %p93
      %p95 = scmp.ne.s32.totalorder %s83, %s84
      %p96 = scmp.eq.s32.totalorder %s18, 1
      %p97 = por %p95, %p96
      %p99 = scmp.ne.s32.totalorder %s84, %s98
      %p100 = scmp.eq.s32.totalorder %s18, 0
      %p101 = por %p99, %p100
      %s102 = ssub.s32 %s19, %s31
      %s103 = ssub.s32 %s20, %s27
      %s104 = sor.u32 %s102, %s103
      %p105 = scmp.eq.s32.totalorder %s104, 0
      %s107 = sadd.s32 %s106, 1
      %s108 = scalar_select %p105, %s106, %s107
      %p111 = pneg %p105
      %p112 = scmp.eq.s32.totalorder %s12, 1
      %p113 = por %p111, %p112
      %p114 = scmp.ne.s32.totalorder %s106, %s109
      %p115 = scmp.eq.s32.totalorder %s12, 0
      %p116 = por %p114, %p115
      %p117 = scmp.ne.s32.totalorder %s106, %s109
      %p118 = scmp.eq.s32.totalorder %s17, 1
      %p119 = por %p117, %p118
      %p120 = scmp.ne.s32.totalorder %s109, %s110
      %p121 = scmp.eq.s32.totalorder %s17, 0
      %p122 = por %p120, %p121
      %p123 = scmp.ne.s32.totalorder %s109, %s110
      %p124 = scmp.eq.s32.totalorder %s18, 1
      %p125 = por %p123, %p124
      %p127 = scmp.ne.s32.totalorder %s110, %s126
      %p128 = scmp.eq.s32.totalorder %s18, 0
      %p129 = por %p127, %p128
      %p130 = scmp.le.s32.totalorder 1, %s12
      %p131 = scmp.lt.s32.totalorder %s12, 3
      %p132 = pnand %p130, %p131
      %p133 = pneg %p132
      // Predicated region
      $region9: #{tpu_custom_call.1} parent=5 // pred_check
        _
      $region10: #{tpu_custom_call.1} parent=5 // pred_check_branch
        %135 = sbr.rel (%p132) target = $region12
      $region11: #{tpu_custom_call.1} parent=5 // pred_region
        %s136 = ssub.s32 %s12, 1
        // Predicated region
        $region13: #{tpu_custom_call.1} parent=11 // pred_check
          %p137 = pneg %p73
        $region14: #{tpu_custom_call.1} parent=11 // pred_check_branch
          %139 = sbr.rel (%p137) target = $region16
        $region15: #{tpu_custom_call.1} parent=11 // pred_region
          _
        $region16: #{tpu_custom_call.1} parent=11 // pred_fallthru
          _
        // Predicated region
        $region17: #{tpu_custom_call.1} parent=11 // pred_check
          %p140 = pneg %p94
        $region18: #{tpu_custom_call.1} parent=11 // pred_check_branch
          %142 = sbr.rel (%p140) target = $region20
        $region19: #{tpu_custom_call.1} parent=11 // pred_region
          _
        $region20: #{tpu_custom_call.1} parent=11 // pred_fallthru
          _
      $region12: #{tpu_custom_call.1} parent=5 // pred_fallthru
        _
      %p143 = scmp.lt.s32.totalorder %s12, 2
      // Predicated region
      $region21: #{tpu_custom_call.1} parent=5 // pred_check
        %p144 = pneg %p143
      $region22: #{tpu_custom_call.1} parent=5 // pred_check_branch
        %146 = sbr.rel (%p144) target = $region24
      $region23: #{tpu_custom_call.1} parent=5 // pred_region
        // Predicated region
        $region25: #{tpu_custom_call.1} parent=23 // pred_check
          %p147 = pneg %p46
        $region26: #{tpu_custom_call.1} parent=23 // pred_check_branch
          %149 = sbr.rel (%p147) target = $region28
        $region27: #{tpu_custom_call.1} parent=23 // pred_region
          %p150 = scmp.lt.s32.totalorder %s19, 1
          %s151 = scalar_select %p150, %s19, 1
          %p152 = scmp.lt.s32.totalorder %s20, 0
          %s153 = scalar_select %p152, %s20, 0
          %s154 = smul.addr %s151, 5
          %s155 = sadd.s32 %s153, %s154
          %s156 = smul.addr %s155, 8
          %s157 = scalar_lea.vmem %s0, %s156
        $region28: #{tpu_custom_call.1} parent=23 // pred_fallthru
          _
      $region24: #{tpu_custom_call.1} parent=5 // pred_fallthru
        _
      %p158 = scmp.le.s32.totalorder 1, %s12
      %p159 = scmp.lt.s32.totalorder %s12, 3
      %p160 = pnand %p158, %p159
      %p161 = pneg %p160
      // Predicated region
      $region29: #{tpu_custom_call.1} parent=5 // pred_check
        _
      $region30: #{tpu_custom_call.1} parent=5 // pred_check_branch
        %163 = sbr.rel (%p160) target = $region32
      $region31: #{tpu_custom_call.1} parent=5 // pred_region
        %s164 = ssub.s32 %s12, 1
        %p165 = scmp.lt.s32.totalorder %s21, 1
        %s166 = scalar_select %p165, %s21, 1
        %p167 = scmp.lt.s32.totalorder %s22, 0
        %s168 = scalar_select %p167, %s22, 0
        %s169 = smul.addr %s166, 5
        %s170 = sadd.s32 %s168, %s169
        %s171 = smul.addr %s170, 8
        %s172 = scalar_lea.vmem %s0, %s171
        %p173 = pneg %p52
        %p174 = pneg %p49
        %p175 = pneg %p73
        %p176 = pneg %p70
        %p177 = pneg %p94
        %p178 = pneg %p91
        %p179 = pneg %p122
        %p180 = pneg %p119
        %s181 = sand.u32 %s109, 1
        %s182 = scalar_lea.sflag [#allocation3], %s181
        %s183 = sand.u32 %s109, 1
        %s184 = smul.addr %s183, 8
        %s185 = scalar_lea.vmem [#allocation2], %s184
        %p186 = scmp.lt.s32.totalorder %s21, 1
        %s187 = scalar_select %p186, %s21, 1
        %p188 = scmp.lt.s32.totalorder %s22, 0
        %s189 = scalar_select %p188, %s22, 0
        %s190 = smul.addr %s187, 5
        %s191 = sadd.s32 %s189, %s190
        %s192 = smul.addr %s191, 8
        %s193 = scalar_lea.vmem %s0, %s192
        %v194 = vld [vmem:[%s1] sm:$0xff]
        %v195 = vld [vmem:[%s193] sm:$0xff]
        %v196 = vld [vmem:[%s193 + $0x8] sm:$0xff]
        %v197 = vld [vmem:[%s193 + $0x10] sm:$0xff]
        %v198 = vld [vmem:[%s193 + $0x18] sm:$0xff]
        %v199 = vld [vmem:[%s193 + $0x20] sm:$0xf]
        %v200 = vld [vmem:[%s2] sm:$0xff]
        %202 = vset.pattern.permute.xlu0 0
        %203 = vperm.xlu0 %202, %v200
        %v204 = vpop.permute.xlu0 %203
        %vm206 = vcmask 293888
        %v208 = vsel %vm206, %v194, 0
        %vm210 = vcmask 1043456
        %v212 = vsel %vm210, %v199, 0
        %214 = vmatpush.msra.mxu0 0.0
        %215 = vmatpush.msra.mxu0 0.0
        %216 = vmatpush.msra.mxu0 0.0
        %217 = vmatpush.msra.mxu0 0.0
        %218 = vmatpush.msra.mxu0 0.0
        %219 = vmatpush.msra.mxu0 0.0
        %220 = vmatpush.msra.mxu0 0.0
        %221 = vmatpush.msra.mxu0 0.0
        %222 = vmatpush.msra.mxu0 0.0
        %223 = vmatpush.msra.mxu0 0.0
        %224 = vmatpush.msra.mxu0 0.0
        %225 = vmatpush.msra.mxu0 %v212
        %226 = vmatpush.msra.mxu0 %v198
        %227 = vmatpush.msra.mxu0 %v197
        %228 = vmatpush.msra.mxu0 %v196
        %229 = vmatpush.msra.mxu0 %v195
        %230 = vmatmul.f32.gmra.mxu0 %v208
        %v231 = vpop.f32.mrf.mxu0
        %v232 = vadd.f32 %v204, %v231
        %233 = vdwg.mxu0
        %v234 = vmax.f32 %v232, 0.0
        %vm235 = vcmask 523264
        %236 = vst.msk [vmem:[%s185] sm:$0xff] %vm235, %v234
        %s237 = sand.u32 %s109, 1
        %s238 = scalar_lea.sflag [#allocation3], %s237
        %s239 = sand.u32 %s109, 1
        %s240 = smul.addr %s239, 8
        %s241 = scalar_lea.vmem [#allocation2], %s240
        // Predicated region
        $region33: #{tpu_custom_call.1} parent=31 // pred_check
          %p242 = pneg %p119
        $region34: #{tpu_custom_call.1} parent=31 // pred_check_branch
          %244 = sbr.rel (%p242) target = $region36
        $region35: #{tpu_custom_call.1} parent=31 // pred_region
          %246 = vsyncadd %s238, 0
          %s247 = sadd.s32 %s22, %s21
          %s248 = smul.addr %s247, 8
          %s249 = scalar_lea.hbm %s3, %s248
          %s251 = sshll.u32 %s241, 4
          %s252 = int_to_ptr.vmem [resolvable:$true] %s251
          %s253 = sshll.u32 %s249, 4
          %s254 = int_to_ptr.hbm [resolvable:$true] %s253
          %256 = dma.vmem_to_hbm [thread:$0]  %s252, 128, %s254, %s238
        $region36: #{tpu_custom_call.1} parent=31 // pred_fallthru
          _
      $region32: #{tpu_custom_call.1} parent=5 // pred_fallthru
        _
      %p257 = scmp.le.s32.totalorder 2, %s12
      // Predicated region
      $region37: #{tpu_custom_call.1} parent=5 // pred_check
        %p258 = pneg %p257
      $region38: #{tpu_custom_call.1} parent=5 // pred_check_branch
        %260 = sbr.rel (%p258) target = $region40
      $region39: #{tpu_custom_call.1} parent=5 // pred_region
        %s261 = ssub.s32 %s12, 2
        // Predicated region
        $region41: #{tpu_custom_call.1} parent=39 // pred_check
          %p262 = pneg %p125
        $region42: #{tpu_custom_call.1} parent=39 // pred_check_branch
          %264 = sbr.rel (%p262) target = $region44
        $region43: #{tpu_custom_call.1} parent=39 // pred_region
          %s265 = sand.u32 %s110, 1
          %s266 = scalar_lea.sflag [#allocation3], %s265
          %s267 = sand.u32 %s110, 1
          %s268 = smul.addr %s267, 8
          %s269 = scalar_lea.vmem [#allocation2], %s268
          %271 = dma.done %s266, 128
        $region44: #{tpu_custom_call.1} parent=39 // pred_fallthru
          _
      $region40: #{tpu_custom_call.1} parent=5 // pred_fallthru
        _
    $region6: #{tpu_custom_call.1} parent=1 // loop_footer
      %s16 = sadd.s32 1, %s12
    $region7: #{tpu_custom_call.1} parent=1 // loop_footer_branch
      %11 = sbr.rel target = $region3
    $region8: #{tpu_custom_call.1} parent=1 // loop_exit
      _
    %272 = vsyncpa [#allocation3], 1
    %s273 = scalar_lea.sflag [#allocation3], 1
    %274 = vsyncpa %s273, 1

</llo_original>
